<compile_context>
chip_gen: v5e
topology: v5e:2x2
jax: 0.10.0
libtpu: 0.0.40
codegen_flags: <defaults>
</compile_context>

<pallas_src>
import jax
import jax.numpy as jnp
from jax import lax
from jax.experimental import pallas as pl
from jax.experimental.pallas import tpu as pltpu


_ONEHOT_MAX_VOCAB = 1024  # above this, T*V*D one-hot MACs lose to a row gather


def _round_up(x, m):
    return ((x + m - 1) // m) * m


def _onehot_kernel(idx_ref, table_ref, out_ref):
    """MXU one-hot gather (bf16 tables, small V). out[t] = table[idx[t]].

    idx_ref:   (T, 1) int32 token ids (VMEM).
    table_ref: (V, D) full table, VMEM-resident (constant index_map).
    out_ref:   (T, D) output tile.
    Out-of-range ids produce zero rows (one-hot never matches).
    """
    V = table_ref.shape[0]
    idx = idx_ref[...]                                   # (T, 1) int32
    # (1, V) iota broadcast against (T, 1) ids: one compare + one cast per
    # element is the only T*V VALU work (matters on v5e where VALU binds).
    iota = lax.broadcasted_iota(jnp.int32, (1, V), 1)
    onehot = (idx == iota).astype(table_ref.dtype)       # (T, V)
    # NOTE: V is left unpadded; MXU K-dim padding only matters once this
    # path is MXU-bound, which the V<=1024 gate avoids.
    out_ref[...] = jnp.dot(
        onehot, table_ref[...], preferred_element_type=jnp.float32
    ).astype(out_ref.dtype)


def _gather_rows_kernel(idx_sref, table_ref, out_ref):
    """Exact row gather. out[t] = table[idx[base + t]] (bit-exact copies).

    idx_sref:  (N_pad,) int32 token ids, scalar-prefetched into SMEM.
    table_ref: (V, D) full table, VMEM-resident (constant index_map).
    out_ref:   (T, D) output tile.
    """
    T = out_ref.shape[0]
    V = table_ref.shape[0]
    base = pl.program_id(0) * T

    def body(r, carry):
        tok = idx_sref[base + r]
        tok = jnp.minimum(jnp.maximum(tok, 0), V - 1)     # clamp (PyTorch raises)
        out_ref[pl.ds(r, 1), :] = table_ref[pl.ds(tok, 1), :]
        return carry

    lax.fori_loop(0, T, body, 0)


def _vmem_budget_bytes():
    """(capacity, usable budget) — generation aware, with Mosaic headroom."""
    try:
        cap = int(pltpu.get_tpu_info().vmem_capacity_bytes)
    except Exception:
        cap = 64 << 20  # conservative: v7x per-TensorCore VMEM
    return cap, (cap * 3) // 4   # ~48 MiB usable on v7x, ~96 MiB on v5e/v6e


def embedding_lookup(indices, table, *, tokens_per_tile=1024):
    """indices: [B, S] int, table: [V, D] -> [B, S, D] (table dtype)."""
    B, S = indices.shape
    V, D = table.shape
    N = B * S
    itemsize = jnp.dtype(table.dtype).itemsize
    cap, budget = _vmem_budget_bytes()

    flat_idx = indices.reshape(-1).astype(jnp.int32)

    table_bytes = V * D * itemsize
    # BlockSpec pipelining double-buffers inputs even for a constant
    # index_map, so the resident table is budgeted at 2x.
    # TODO(synk): pipeline_mode=pl.Buffered(1) on the table spec would reclaim
    # the second buffer (doubling the max resident table) once verified.
    resident_table = 2 * table_bytes
    headroom = 4 << 20

    if resident_table + 2 * 8 * D * itemsize + headroom > budget:
        # TODO(synk): HBM-resident tables need a manual DMA row-gather
        # (memory_space=pl.ANY + make_async_copy ring driven by scalar-
        # prefetched ids); fall back to XLA's gather for now.
        return jnp.take(table, flat_idx, axis=0).reshape(B, S, D)

    # One-hot MXU path only for MXU-native bf16 tables with small vocab
    # (its cost scales with V and f32 MXU passes are slow / lossy); every
    # other case takes the exact row-gather path.
    use_onehot = (jnp.dtype(table.dtype) == jnp.bfloat16) and (V <= _ONEHOT_MAX_VOCAB)

    def _tiles_bytes(t):
        b = 2 * t * D * itemsize            # double-buffered output tiles
        if use_onehot:
            b += 2 * t * 128 * 4            # (T,1) int32 id blocks pad lane->128
            b += t * _round_up(V, 128) * 4  # materialized (T,V) one-hot
        return b

    # Tile height: big (amortize ~0.35us/step, dense writeback), VMEM-capped.
    T = min(_round_up(tokens_per_tile, 8), _round_up(N, 8))
    while T > 8 and resident_table + _tiles_bytes(T) + headroom > budget:
        T = max(8, _round_up(T // 2, 8))

    # Prefer a tile height that divides N: avoids output padding and the
    # post-kernel out[:N] slice (an extra full read+write of the output).
    if N % T != 0:
        for cand in range(T, 7, -8):
            if N % cand == 0:
                T = cand
                break
    N_pad = _round_up(N, T)
    num_tiles = N_pad // T
    if N_pad != N:
        flat_idx = jnp.pad(flat_idx, (0, N_pad - N))  # pad rows gather id 0

    vmem_limit = min(int(resident_table + _tiles_bytes(T) + 2 * headroom), cap)
    vmem_limit = max(vmem_limit, 32 << 20)

    out_shape = jax.ShapeDtypeStruct((N_pad, D), table.dtype)
    out_bytes = N_pad * D * itemsize
    idx_bytes = N_pad * 4

    if use_onehot:
        cost = pl.CostEstimate(flops=2 * N_pad * V * D, transcendentals=0,
                               bytes_accessed=table_bytes + idx_bytes + out_bytes)
        out_flat = pl.pallas_call(
            _onehot_kernel,
            out_shape=out_shape,
            grid_spec=pltpu.PrefetchScalarGridSpec(
                num_scalar_prefetch=0,
                grid=(num_tiles,),
                in_specs=[
                    pl.BlockSpec((T, 1), lambda i: (i, 0)),   # per-tile ids
                    pl.BlockSpec((V, D), lambda i: (0, 0)),   # resident table
                ],
                out_specs=pl.BlockSpec((T, D), lambda i: (i, 0)),
            ),
            compiler_params=pltpu.CompilerParams(
                dimension_semantics=("parallel",),
                vmem_limit_bytes=int(vmem_limit)),
            cost_estimate=cost,
        )(flat_idx.reshape(N_pad, 1), table)
    else:
        cost = pl.CostEstimate(flops=0, transcendentals=0,
                               bytes_accessed=table_bytes + idx_bytes + out_bytes)
        out_flat = pl.pallas_call(
            _gather_rows_kernel,
            out_shape=out_shape,
            grid_spec=pltpu.PrefetchScalarGridSpec(
                num_scalar_prefetch=1,                        # ids -> SMEM
                grid=(num_tiles,),
                in_specs=[pl.BlockSpec((V, D), lambda i, idx: (0, 0))],
                out_specs=pl.BlockSpec((T, D), lambda i, idx: (i, 0)),
            ),
            compiler_params=pltpu.CompilerParams(
                dimension_semantics=("parallel",),
                vmem_limit_bytes=int(vmem_limit)),
            cost_estimate=cost,
        )(flat_idx, table)

    if N_pad != N:
        out_flat = out_flat[:N]
    return out_flat.reshape(B, S, D)


if __name__ == "__main__":
    key = jax.random.PRNGKey(0)
    k1, k2, k3, k4, k5, k6 = jax.random.split(key, 6)

    # --- Test 1: the module config from the spec (V=64, D=128, f32, src [2,8]).
    # f32 tables take the exact row-gather path (bit-exact nn.Embedding rows).
    V1, D1, B1, S1 = 64, 128, 2, 8
    table1 = jax.random.normal(k1, (V1, D1), dtype=jnp.float32)
    src1 = jax.random.randint(k2, (B1, S1), 0, V1, dtype=jnp.int32)
    out1 = jax.block_until_ready(embedding_lookup(src1, table1))
    ref1 = jnp.take(table1, src1, axis=0)
    assert out1.shape == (B1, S1, D1)
    assert jnp.array_equal(out1, ref1), "f32 gather path mismatch"

    # --- Test 2: bf16 table, small vocab -> one-hot MXU path.
    V2, D2, B2, S2 = 512, 128, 2, 64
    table2 = jax.random.normal(k3, (V2, D2), dtype=jnp.bfloat16)
    src2 = jax.random.randint(k4, (B2, S2), 0, V2, dtype=jnp.int32)
    out2 = jax.block_until_ready(embedding_lookup(src2, table2))
    ref2 = jnp.take(table2, src2, axis=0)
    assert jnp.allclose(out2.astype(jnp.float32), ref2.astype(jnp.float32),
                        atol=1e-5), "bf16 one-hot path mismatch"

    # --- Test 3: larger vocab, multi-tile grid, ragged token count (pads).
    V3, D3, B3, S3 = 2048, 256, 3, 13        # N = 39 tokens, 3 tiles of 16
    table3 = jax.random.normal(k5, (V3, D3), dtype=jnp.float32)
    src3 = jax.random.randint(k6, (B3, S3), 0, V3, dtype=jnp.int32)
    out3 = jax.block_until_ready(embedding_lookup(src3, table3, tokens_per_tile=16))
    ref3 = jnp.take(table3, src3, axis=0)
    assert jnp.array_equal(out3, ref3), "multi-tile gather path mismatch"

    print("KERNEL_OK")
</pallas_src>

<mosaic_0001>
module attributes {stable_mosaic.version = 11 : i64} {
  func.func @_gather_rows_kernel(%arg0: i32, %arg1: memref<16xi32, #tpu.memory_space<smem>>, %arg2: memref<64x128xf32, #tpu.memory_space<vmem>>, %arg3: memref<16x128xf32, #tpu.memory_space<vmem>>) attributes {dimension_semantics = [#tpu.dimension_semantics<parallel>], iteration_bounds = array<i64: 1>, scalar_prefetch = 1 : i64, scratch_operands = 0 : i64, tpu.core_type = #tpu.core_type<tc>, window_params = [{pipeline_mode = #tpu.pipeline_mode<synchronous>, transform_indices = @transform_0, window_bounds = array<i64: 64, 128>}, {transform_indices = @transform_1, window_bounds = array<i64: 16, 128>}]} {
    %c16_i32 = arith.constant 16 : i32
    %0 = arith.muli %arg0, %c16_i32 : i32
    %c0_i32 = arith.constant 0 : i32
    %c16_i32_0 = arith.constant 16 : i32
    %1 = arith.addi %c0_i32, %c16_i32_0 : i32
    %c1_i32 = arith.constant 1 : i32
    scf.for %arg4 = %c0_i32 to %1 step %c1_i32  : i32 {
      %2 = arith.addi %0, %arg4 : i32
      %3 = arith.index_cast %2 : i32 to index
      %4 = memref.load %arg1[%3] : memref<16xi32, #tpu.memory_space<smem>>
      %c0_i32_2 = arith.constant 0 : i32
      %5 = arith.maxsi %4, %c0_i32_2 : i32
      %c63_i32 = arith.constant 63 : i32
      %6 = arith.minsi %5, %c63_i32 : i32
      %7 = arith.index_cast %6 : i32 to index
      %c0 = arith.constant 0 : index
      %8 = vector.load %arg2[%7, %c0] : memref<64x128xf32, #tpu.memory_space<vmem>>, vector<1x128xf32>
      %9 = arith.index_cast %arg4 : i32 to index
      %c0_3 = arith.constant 0 : index
      %10 = vector.load %arg3[%9, %c0_3] : memref<16x128xf32, #tpu.memory_space<vmem>>, vector<1x128xf32>
      tpu.vector_store %arg3[%9, %c0_3], %8 {strides = array<i32>} : memref<16x128xf32, #tpu.memory_space<vmem>>, vector<1x128xf32>,
    }
    %c16_i32_1 = arith.constant 16 : i32
    return
  }
  func.func @transform_0(%arg0: i32, %arg1: memref<16xi32, #tpu.memory_space<smem>>) -> (i32, i32) {
    %c0_i32 = arith.constant 0 : i32
    %c0_i32_0 = arith.constant 0 : i32
    %c0_i32_1 = arith.constant 0 : i32
    return %c0_i32, %c0_i32_0 : i32, i32
  }
  func.func @transform_1(%arg0: i32, %arg1: memref<16xi32, #tpu.memory_space<smem>>) -> (i32, i32) {
    %c0_i32 = arith.constant 0 : i32
    %c0_i32_0 = arith.constant 0 : i32
    return %arg0, %c0_i32 : i32, i32
  }
}

</mosaic_0001>

<llo_original>
// kernel: tpu_custom_call.1
$region0: #{tpu_custom_call.1}
  #allocation0 [shape = 'u32[]', space=smem, size = 0x4, offset = 0x4, fixed_abs, tag = 'smem constant byte address 0x4 - core index']
  #allocation1 [shape = 'u32[72,128]{1,0:T(1,128)}', space=vmem, size = 0x9000, scoped, tag = 'internal scratch']
  #allocation2 [shape = 's32[1]{0}', space=sflag, size = 0x4, scoped, tag = 'scoped memory for tpu_custom_call.1']
  #allocation3 [shape = 'u8[512]{0}', space=smem, size = 0x200, scoped, tag = 'prefetched SMEM operand 0']
  %s0 = inlined_call_operand.hbm [shape: s32[16], index: 0, kind: input, shape index: {}]
  %s1 = inlined_call_operand.hbm [shape: f32[64,128], index: 1, kind: input, shape index: {}]
  %s2 = inlined_call_operand.hbm [shape: f32[16,128], index: 2, kind: output, shape index: {}]
  %s3 = sld [smem:[#allocation0]]
  $region25: #{tpu_custom_call.1} parent=0
    _
  %s5 = ssub.s32 1, %s3
  %s6 = scalar_select 0, %s5, %s3
  %s8 = sshll.u32 %s0, 4
  %s9 = int_to_ptr.hbm [resolvable:$true] %s8
  %11 = dma.hbm_to_smem %s9, 16, [#allocation3], [#allocation2]
  %13 = dma.done [#allocation2], 16
  %14 = sfence
  $region1: #{tpu_custom_call.1} parent=0
    #allocation4 [shape = 'u8[32768]{0}', space=vmem, size = 0x8000, scoped, tag = 'input window, operand 1, single buffered']
    #allocation5 [shape = 's32[1]{0}', space=sflag, size = 0x4, scoped, tag = 'scoped memory for tpu_custom_call.1']
    #allocation6 [shape = 's32[1]{0}', space=sflag, size = 0x4, scoped, tag = 'scoped memory for tpu_custom_call.1']
    #allocation7 [shape = 'u8[8192]{0}', space=vmem, size = 0x2000, scoped, tag = 'output window, operand 0, single buffered']
    %15 = vsyncpa [#allocation5], 0
    %16 = vsyncpa [#allocation6], 0
    // Predicated region
    $region2: #{tpu_custom_call.1} parent=1 // pred_check
      _
    $region3: #{tpu_custom_call.1} parent=1 // pred_check_branch
      %18 = sbr.rel (0) target = $region5
    $region4: #{tpu_custom_call.1} parent=1 // pred_region
      %20 = vsyncadd [#allocation5], 0
      %s21 = sshll.u32 %s1, 4
      %s22 = int_to_ptr.hbm [resolvable:$true] %s21
      %s23 = sshll.u32 [#allocation4], 4
      %s24 = int_to_ptr.vmem [resolvable:$true] %s23
      %29 = dma.hbm_to_vmem [thread:$0]  %s22, 1024, %s24, [#allocation5], 128, 128, 8
    $region5: #{tpu_custom_call.1} parent=1 // pred_fallthru
      _
    // Predicated region
    $region6: #{tpu_custom_call.1} parent=1 // pred_check
      _
    $region7: #{tpu_custom_call.1} parent=1 // pred_check_branch
      %31 = sbr.rel (0) target = $region9
    $region8: #{tpu_custom_call.1} parent=1 // pred_region
      %33 = dma.done [#allocation5], 1024
    $region9: #{tpu_custom_call.1} parent=1 // pred_fallthru
      _
    %s34 = smul.u32 0, 16
    loop: start=0, step=1, limit=16
    $region10: #{tpu_custom_call.1} parent=1 // loop_pre_header
      _
    $region11: #{tpu_custom_call.1} parent=1 // loop_header
      %s36 = sphi 0, %s40
      %p37 = scmp.ge.s32.totalorder %s36, 16
    $region12: #{tpu_custom_call.1} parent=1 // loop_header_branch
      %39 = sbr.rel (%p37) target = $region16
    $region13: #{tpu_custom_call.1} parent=1 // loop_body
      %s41 = sadd.s32 %s34, %s36
      %s42 = sld [smem:[#allocation3 + %s41]]
      %p43 = scmp.gt.s32.totalorder %s42, 0
      %s44 = scalar_select %p43, %s42, 0
      %p45 = scmp.lt.s32.totalorder %s44, 63
      %s46 = scalar_select %p45, %s44, 63
      %s47 = scalar_lea.vmem [#allocation4], %s46
      %v48 = vld [vmem:[%s47] sm:$0x1]
      %s49 = scalar_lea.vmem [#allocation7], %s36
      %50 = vst [vmem:[%s49] sm:$0x1] %v48
    $region14: #{tpu_custom_call.1} parent=1 // loop_footer
      %s40 = sadd.s32 1, %s36
    $region15: #{tpu_custom_call.1} parent=1 // loop_footer_branch
      %35 = sbr.rel target = $region11
    $region16: #{tpu_custom_call.1} parent=1 // loop_exit
      _
    // Predicated region
    $region17: #{tpu_custom_call.1} parent=1 // pred_check
      _
    $region18: #{tpu_custom_call.1} parent=1 // pred_check_branch
      %52 = sbr.rel (0) target = $region20
    $region19: #{tpu_custom_call.1} parent=1 // pred_region
      %54 = vsyncadd [#allocation6], 0
      %s55 = sshll.u32 [#allocation7], 4
      %s56 = int_to_ptr.vmem [resolvable:$true] %s55
      %s57 = sshll.u32 %s2, 4
      %s58 = int_to_ptr.hbm [resolvable:$true] %s57
      %63 = dma.vmem_to_hbm [thread:$0]  %s56, 256, %s58, [#allocation6], 128, 128, 8
    $region20: #{tpu_custom_call.1} parent=1 // pred_fallthru
      _
    // Predicated region
    $region21: #{tpu_custom_call.1} parent=1 // pred_check
      _
    $region22: #{tpu_custom_call.1} parent=1 // pred_check_branch
      %65 = sbr.rel (0) target = $region24
    $region23: #{tpu_custom_call.1} parent=1 // pred_region
      %67 = dma.done [#allocation6], 256
    $region24: #{tpu_custom_call.1} parent=1 // pred_fallthru
      _
    %68 = vsyncpa [#allocation5], 1
    %69 = vsyncpa [#allocation6], 1

</llo_original>
